<compile_context>
chip_gen: v6e
topology: v6e:2x2x1
jax: 0.10.0
libtpu: 0.0.40
codegen_flags: <defaults>
</compile_context>

<pallas_src>
import functools

import jax
import jax.numpy as jnp
from jax.experimental import pallas as pl
from jax.experimental.pallas import tpu as pltpu

LEAKY_SLOPE = 0.01   # torch.nn.LeakyReLU default negative_slope
LANE = 128           # TPU lane width (last dim)
BATCH_ALIGN = 16     # bf16 sublane packing
_MIB = 1024 * 1024


def _round_up(x, m):
    return ((x + m - 1) // m) * m


def _vmem_capacity_bytes():
    try:
        return int(pltpu.get_tpu_info().vmem_capacity_bytes)
    except Exception:
        return 64 * _MIB  # conservative fallback (v7x per-TC)


_VMEM_CAP = _vmem_capacity_bytes()


def _pad2d(a, rows, cols):
    return jnp.pad(a, ((0, rows - a.shape[0]), (0, cols - a.shape[1])))


def xavier_normal(key, fan_in, fan_out, dtype=jnp.float32):
    # matches torch.nn.init.xavier_normal_ (gain=1): std = sqrt(2/(fan_in+fan_out))
    std = (2.0 / (fan_in + fan_out)) ** 0.5
    # stored as (fan_in, fan_out) == torch weight (fan_out, fan_in) transposed
    return std * jax.random.normal(key, (fan_in, fan_out), dtype=dtype)


def _policy_mlp_kernel(x_ref, w1_ref, b1_ref, w2_ref, b2_ref, wh_ref, bh_ref,
                       o_ref):
    """Fused (Linear -> LeakyReLU) x2 -> Linear head for one batch tile.

    Matmul operands in bf16 (MXU-native), accumulation/bias/LeakyReLU in fp32.
    """
    cdt = w1_ref.dtype
    x = x_ref[...].astype(cdt)

    h1 = jnp.dot(x, w1_ref[...], preferred_element_type=jnp.float32) + b1_ref[...]
    h1 = jnp.maximum(h1, LEAKY_SLOPE * h1).astype(cdt)

    h2 = jnp.dot(h1, w2_ref[...], preferred_element_type=jnp.float32) + b2_ref[...]
    h2 = jnp.maximum(h2, LEAKY_SLOPE * h2).astype(cdt)

    logits = jnp.dot(h2, wh_ref[...], preferred_element_type=jnp.float32) + bh_ref[...]
    o_ref[...] = logits.astype(o_ref.dtype)


@functools.partial(jax.jit,
                   static_argnames=("branches", "single", "tile_b", "out_dtype"))
def _policy_forward(x, w1, b1, w2, b2, wh, bh, *, branches, single, tile_b,
                    out_dtype):
    B, in_f = x.shape
    in_p, hid_p = w1.shape
    out_p = wh.shape[1]
    out_total = sum(branches)
    b_pad = _round_up(B, tile_b)
    cdt = w1.dtype

    # Pass x through untouched when it is already lane- and tile-aligned
    # (bf16 cast happens in-kernel).  Otherwise materialize one zero-padded
    # bf16 copy (zero padding keeps the valid-region math exact).
    if B == b_pad and in_f == in_p:
        xp = x
    else:
        xp = jnp.zeros((b_pad, in_p), cdt).at[:B, :in_f].set(x.astype(cdt))

    grid = (b_pad // tile_b,)

    flops = 2 * b_pad * (in_p * hid_p + hid_p * hid_p + hid_p * out_p)
    weight_bytes = ((w1.size + w2.size + wh.size) * w1.dtype.itemsize
                    + (b1.size + b2.size + bh.size) * 4)
    out_itemsize = jnp.dtype(out_dtype).itemsize
    bytes_accessed = (xp.size * xp.dtype.itemsize + weight_bytes
                      + b_pad * out_p * out_itemsize)

    # VMEM plan: single-buffered resident weights/biases, double-buffered
    # x/out tiles, plus live fp32 activations.  2x margin, 32 MiB floor,
    # capped to ~13/16 of this generation's physical VMEM (leaves headroom
    # for Mosaic internal scratch: ~104 MiB on v5e/v6e, ~52 MiB on v7x).
    vmem_est = (weight_bytes
                + 2 * tile_b * in_p * xp.dtype.itemsize
                + 2 * tile_b * out_p * out_itemsize
                + 2 * tile_b * hid_p * 4
                + tile_b * max(hid_p, out_p) * 4)
    vmem_cap = (_VMEM_CAP * 13) // 16
    vmem_limit = int(min(max(2 * vmem_est, 32 * _MIB), vmem_cap))

    resident = dict(pipeline_mode=pl.Buffered(1))  # fetched once, single buffer

    logits_p = pl.pallas_call(
        _policy_mlp_kernel,
        out_shape=jax.ShapeDtypeStruct((b_pad, out_p), out_dtype),
        grid_spec=pltpu.PrefetchScalarGridSpec(
            num_scalar_prefetch=0,
            grid=grid,
            in_specs=[
                pl.BlockSpec((tile_b, in_p), lambda i: (i, 0)),              # x: batch-tiled
                pl.BlockSpec((in_p, hid_p), lambda i: (0, 0), **resident),   # w1
                pl.BlockSpec((1, hid_p), lambda i: (0, 0), **resident),      # b1
                pl.BlockSpec((hid_p, hid_p), lambda i: (0, 0), **resident),  # w2
                pl.BlockSpec((1, hid_p), lambda i: (0, 0), **resident),      # b2
                pl.BlockSpec((hid_p, out_p), lambda i: (0, 0), **resident),  # wh
                pl.BlockSpec((1, out_p), lambda i: (0, 0), **resident),      # bh
            ],
            out_specs=pl.BlockSpec((tile_b, out_p), lambda i: (i, 0)),
        ),
        compiler_params=pltpu.CompilerParams(
            dimension_semantics=("parallel",),   # megacore-shard batch tiles
            vmem_limit_bytes=vmem_limit,
        ),
        cost_estimate=pl.CostEstimate(
            flops=flops, transcendentals=0, bytes_accessed=bytes_accessed),
    )(xp, w1, b1, w2, b2, wh, bh)

    # Slice off padding; branch split stays inside jit so it fuses with consumers.
    logits = logits_p[:B, :out_total].astype(jnp.float32)
    if single:
        return logits
    outs, off = [], 0
    for br in branches:
        outs.append(logits[:, off:off + br])
        off += br
    return tuple(outs)


class DiscretePolicyNetworkPallas:
    """JAX/Pallas port of DiscretePolicyNetwork.

    out_features: int  -> single categorical, forward returns (B, out_features)
    out_features: list -> multi-discrete,     forward returns list of (B, branch)
    """

    def __init__(self, in_features, out_features, hidden_size, *, key,
                 compute_dtype=jnp.bfloat16, max_batch_tile=512,
                 logits_dtype=jnp.float32):
        self.in_features = in_features
        self.hidden_size = hidden_size
        self.compute_dtype = compute_dtype
        self.max_batch_tile = max(BATCH_ALIGN, _round_up(max_batch_tile, BATCH_ALIGN))
        self.logits_dtype = logits_dtype
        self.out_is_multi = not isinstance(out_features, int)
        self.branches = tuple(out_features) if self.out_is_multi else (out_features,)
        self.out_total = sum(self.branches)

        # Hardware-friendly padded dims (multiples of 128 lanes).  Note: on
        # v6e/v7x a *model-level* hidden size that is a multiple of 256 fills
        # the 256x256 MXU better; we do not force-pad small hiddens to 256
        # since that would double real FLOPs.
        self.in_p = _round_up(in_features, LANE)
        self.hid_p = _round_up(hidden_size, LANE)
        self.out_p = _round_up(self.out_total, LANE)

        k1, k2, *khs = jax.random.split(key, 2 + len(self.branches))
        # fp32 master weights at logical (unpadded) shapes; init matches torch.
        self.w1_f32 = xavier_normal(k1, in_features, hidden_size)
        self.w2_f32 = xavier_normal(k2, hidden_size, hidden_size)
        self.wh_f32 = jnp.concatenate(
            [xavier_normal(kh, hidden_size, br)
             for kh, br in zip(khs, self.branches)], axis=1)

        # Padded bf16 copies used by the kernel (zero padding keeps math exact).
        self.w1 = _pad2d(self.w1_f32, self.in_p, self.hid_p).astype(compute_dtype)
        self.w2 = _pad2d(self.w2_f32, self.hid_p, self.hid_p).astype(compute_dtype)
        self.wh = _pad2d(self.wh_f32, self.hid_p, self.out_p).astype(compute_dtype)
        # Biases are zero (the torch module does nn.init.constant_(bias, 0.0));
        # kept in fp32 and added to the fp32 accumulator.
        self.b1 = jnp.zeros((1, self.hid_p), jnp.float32)
        self.b2 = jnp.zeros((1, self.hid_p), jnp.float32)
        self.bh = jnp.zeros((1, self.out_p), jnp.float32)

    def _tile_for_batch(self, B):
        """Bucket B to a few padded sizes (limits recompiles) and pick a tile
        that gives >=2 grid steps whenever possible (megacore on v7x)."""
        b = _round_up(B, BATCH_ALIGN)
        if b <= self.max_batch_tile:
            b_pad = max(BATCH_ALIGN, pl.next_power_of_2(b))
        else:
            b_pad = _round_up(b, self.max_batch_tile)
        if b_pad >= 2 * BATCH_ALIGN:
            tile_b = min(self.max_batch_tile, _round_up(b_pad // 2, BATCH_ALIGN))
        else:
            tile_b = b_pad
        return tile_b

    def __call__(self, x):
        tile_b = self._tile_for_batch(x.shape[0])
        out = _policy_forward(x, self.w1, self.b1, self.w2, self.b2,
                              self.wh, self.bh,
                              branches=self.branches,
                              single=not self.out_is_multi,
                              tile_b=tile_b,
                              out_dtype=self.logits_dtype)
        return out if not self.out_is_multi else list(out)


def _reference_forward(net, x):
    """Pure-JAX reference mirroring the kernel math (bf16 operands, fp32 accum)."""
    cdt = net.compute_dtype
    lrelu = lambda v: jnp.maximum(v, LEAKY_SLOPE * v)
    h = lrelu(jnp.dot(x.astype(cdt), net.w1_f32.astype(cdt),
                      preferred_element_type=jnp.float32))          # + b1 == 0
    h = lrelu(jnp.dot(h.astype(cdt), net.w2_f32.astype(cdt),
                      preferred_element_type=jnp.float32))          # + b2 == 0
    logits = jnp.dot(h.astype(cdt), net.wh_f32.astype(cdt),
                     preferred_element_type=jnp.float32)             # + bh == 0
    if not net.out_is_multi:
        return logits
    outs, off = [], 0
    for br in net.branches:
        outs.append(logits[:, off:off + br])
        off += br
    return outs


if __name__ == "__main__":
    key = jax.random.PRNGKey(0)
    k_single, k_multi, k_x, k_x2, k_x3 = jax.random.split(key, 5)

    B, IN, HID = 2, 16, 32
    x = jax.random.normal(k_x, (B, IN), jnp.float32)

    # Single-categorical head
    net_single = DiscretePolicyNetworkPallas(IN, 6, HID, key=k_single)
    out_single = jax.block_until_ready(net_single(x))
    ref_single = _reference_forward(net_single, x)
    assert out_single.shape == (B, 6)
    assert jnp.allclose(out_single, ref_single, atol=2e-3, rtol=2e-3)

    # Multi-discrete heads
    branches = [3, 4, 5]
    net_multi = DiscretePolicyNetworkPallas(IN, branches, HID, key=k_multi)
    out_multi = [jax.block_until_ready(o) for o in net_multi(x)]
    ref_multi = _reference_forward(net_multi, x)
    for o, r, br in zip(out_multi, ref_multi, branches):
        assert o.shape == (B, br)
        assert jnp.allclose(o, r, atol=2e-3, rtol=2e-3)

    # Exercise batch tiling with grid > 1 and a padded tail tile.
    net_tiled = DiscretePolicyNetworkPallas(IN, 6, HID, key=k_single,
                                            max_batch_tile=16)
    x_big = jax.random.normal(k_x2, (40, IN), jnp.float32)   # -> 3 tiles of 16
    out_big = jax.block_until_ready(net_tiled(x_big))
    ref_big = _reference_forward(net_tiled, x_big)
    assert out_big.shape == (40, 6)
    assert jnp.allclose(out_big, ref_big, atol=2e-3, rtol=2e-3)

    # Exercise the no-pad fast path (in_features already lane-aligned, batch
    # equals the bucketed pad) with the default large tile config.
    net_aligned = DiscretePolicyNetworkPallas(128, 6, 128, key=k_single)
    x_al = jax.random.normal(k_x3, (64, 128), jnp.float32)   # b_pad=64 -> 2 tiles
    out_al = jax.block_until_ready(net_aligned(x_al))
    ref_al = _reference_forward(net_aligned, x_al)
    assert out_al.shape == (64, 6)
    assert jnp.allclose(out_al, ref_al, atol=2e-3, rtol=2e-3)

    print("KERNEL_OK")
</pallas_src>

<mosaic_0001>
module attributes {stable_mosaic.version = 11 : i64} {
  func.func @_policy_mlp_kernel(%arg0: i32, %arg1: memref<16x128xbf16, #tpu.memory_space<vmem>>, %arg2: memref<128x128xbf16, #tpu.memory_space<vmem>>, %arg3: memref<1x128xf32, #tpu.memory_space<vmem>>, %arg4: memref<128x128xbf16, #tpu.memory_space<vmem>>, %arg5: memref<1x128xf32, #tpu.memory_space<vmem>>, %arg6: memref<128x128xbf16, #tpu.memory_space<vmem>>, %arg7: memref<1x128xf32, #tpu.memory_space<vmem>>, %arg8: memref<16x128xf32, #tpu.memory_space<vmem>>) attributes {dimension_semantics = [#tpu.dimension_semantics<parallel>], iteration_bounds = array<i64: 1>, scalar_prefetch = 0 : i64, scratch_operands = 0 : i64, tpu.core_type = #tpu.core_type<tc>, window_params = [{transform_indices = @transform_0, window_bounds = array<i64: 16, 128>}, {pipeline_mode = #tpu.pipeline_mode<synchronous>, transform_indices = @transform_1, window_bounds = array<i64: 128, 128>}, {pipeline_mode = #tpu.pipeline_mode<synchronous>, transform_indices = @transform_2, window_bounds = array<i64: 1, 128>}, {pipeline_mode = #tpu.pipeline_mode<synchronous>, transform_indices = @transform_3, window_bounds = array<i64: 128, 128>}, {pipeline_mode = #tpu.pipeline_mode<synchronous>, transform_indices = @transform_4, window_bounds = array<i64: 1, 128>}, {pipeline_mode = #tpu.pipeline_mode<synchronous>, transform_indices = @transform_5, window_bounds = array<i64: 128, 128>}, {pipeline_mode = #tpu.pipeline_mode<synchronous>, transform_indices = @transform_6, window_bounds = array<i64: 1, 128>}, {transform_indices = @transform_7, window_bounds = array<i64: 16, 128>}]} {
    %c0 = arith.constant 0 : index
    %c0_0 = arith.constant 0 : index
    %0 = vector.load %arg1[%c0, %c0_0] : memref<16x128xbf16, #tpu.memory_space<vmem>>, vector<16x128xbf16>
    %c0_1 = arith.constant 0 : index
    %c0_2 = arith.constant 0 : index
    %1 = vector.load %arg2[%c0_1, %c0_2] : memref<128x128xbf16, #tpu.memory_space<vmem>>, vector<128x128xbf16>
    %cst = arith.constant dense<0.000000e+00> : vector<16x128xf32>
    %2 = tpu.matmul %0, %1, %cst {dimension_numbers = #tpu.dot_dimension_numbers<[1], [0], [0], [1], [0, 0, 1, 1], [], []>} : vector<16x128xbf16>, vector<128x128xbf16>, vector<16x128xf32> -> vector<16x128xf32>
    %c0_3 = arith.constant 0 : index
    %c0_4 = arith.constant 0 : index
    %3 = vector.load %arg3[%c0_3, %c0_4] : memref<1x128xf32, #tpu.memory_space<vmem>>, vector<1x128xf32>
    %4 = vector.broadcast %3 : vector<1x128xf32> to vector<16x128xf32>
    %5 = arith.addf %2, %4 : vector<16x128xf32>
    %cst_5 = arith.constant 0.00999999977 : f32
    %6 = vector.broadcast %cst_5 : f32 to vector<16x128xf32>
    %7 = arith.mulf %6, %5 : vector<16x128xf32>
    %8 = arith.maximumf %5, %7 : vector<16x128xf32>
    %9 = arith.truncf %8 : vector<16x128xf32> to vector<16x128xbf16>
    %c0_6 = arith.constant 0 : index
    %c0_7 = arith.constant 0 : index
    %10 = vector.load %arg4[%c0_6, %c0_7] : memref<128x128xbf16, #tpu.memory_space<vmem>>, vector<128x128xbf16>
    %cst_8 = arith.constant dense<0.000000e+00> : vector<16x128xf32>
    %11 = tpu.matmul %9, %10, %cst_8 {dimension_numbers = #tpu.dot_dimension_numbers<[1], [0], [0], [1], [0, 0, 1, 1], [], []>} : vector<16x128xbf16>, vector<128x128xbf16>, vector<16x128xf32> -> vector<16x128xf32>
    %c0_9 = arith.constant 0 : index
    %c0_10 = arith.constant 0 : index
    %12 = vector.load %arg5[%c0_9, %c0_10] : memref<1x128xf32, #tpu.memory_space<vmem>>, vector<1x128xf32>
    %13 = vector.broadcast %12 : vector<1x128xf32> to vector<16x128xf32>
    %14 = arith.addf %11, %13 : vector<16x128xf32>
    %cst_11 = arith.constant 0.00999999977 : f32
    %15 = vector.broadcast %cst_11 : f32 to vector<16x128xf32>
    %16 = arith.mulf %15, %14 : vector<16x128xf32>
    %17 = arith.maximumf %14, %16 : vector<16x128xf32>
    %18 = arith.truncf %17 : vector<16x128xf32> to vector<16x128xbf16>
    %c0_12 = arith.constant 0 : index
    %c0_13 = arith.constant 0 : index
    %19 = vector.load %arg6[%c0_12, %c0_13] : memref<128x128xbf16, #tpu.memory_space<vmem>>, vector<128x128xbf16>
    %cst_14 = arith.constant dense<0.000000e+00> : vector<16x128xf32>
    %20 = tpu.matmul %18, %19, %cst_14 {dimension_numbers = #tpu.dot_dimension_numbers<[1], [0], [0], [1], [0, 0, 1, 1], [], []>} : vector<16x128xbf16>, vector<128x128xbf16>, vector<16x128xf32> -> vector<16x128xf32>
    %c0_15 = arith.constant 0 : index
    %c0_16 = arith.constant 0 : index
    %21 = vector.load %arg7[%c0_15, %c0_16] : memref<1x128xf32, #tpu.memory_space<vmem>>, vector<1x128xf32>
    %22 = vector.broadcast %21 : vector<1x128xf32> to vector<16x128xf32>
    %23 = arith.addf %20, %22 : vector<16x128xf32>
    %c0_17 = arith.constant 0 : index
    %c0_18 = arith.constant 0 : index
    %24 = vector.load %arg8[%c0_17, %c0_18] : memref<16x128xf32, #tpu.memory_space<vmem>>, vector<16x128xf32>
    tpu.vector_store %arg8[%c0_17, %c0_18], %23 {strides = array<i32>} : memref<16x128xf32, #tpu.memory_space<vmem>>, vector<16x128xf32>,
    return
  }
  func.func @transform_0(%arg0: i32) -> (i32, i32) {
    %c0_i32 = arith.constant 0 : i32
    %c0_i32_0 = arith.constant 0 : i32
    return %arg0, %c0_i32 : i32, i32
  }
  func.func @transform_1(%arg0: i32) -> (i32, i32) {
    %c0_i32 = arith.constant 0 : i32
    %c0_i32_0 = arith.constant 0 : i32
    %c0_i32_1 = arith.constant 0 : i32
    return %c0_i32, %c0_i32_0 : i32, i32
  }
  func.func @transform_2(%arg0: i32) -> (i32, i32) {
    %c0_i32 = arith.constant 0 : i32
    %c0_i32_0 = arith.constant 0 : i32
    %c0_i32_1 = arith.constant 0 : i32
    return %c0_i32, %c0_i32_0 : i32, i32
  }
  func.func @transform_3(%arg0: i32) -> (i32, i32) {
    %c0_i32 = arith.constant 0 : i32
    %c0_i32_0 = arith.constant 0 : i32
    %c0_i32_1 = arith.constant 0 : i32
    return %c0_i32, %c0_i32_0 : i32, i32
  }
  func.func @transform_4(%arg0: i32) -> (i32, i32) {
    %c0_i32 = arith.constant 0 : i32
    %c0_i32_0 = arith.constant 0 : i32
    %c0_i32_1 = arith.constant 0 : i32
    return %c0_i32, %c0_i32_0 : i32, i32
  }
  func.func @transform_5(%arg0: i32) -> (i32, i32) {
    %c0_i32 = arith.constant 0 : i32
    %c0_i32_0 = arith.constant 0 : i32
    %c0_i32_1 = arith.constant 0 : i32
    return %c0_i32, %c0_i32_0 : i32, i32
  }
  func.func @transform_6(%arg0: i32) -> (i32, i32) {
    %c0_i32 = arith.constant 0 : i32
    %c0_i32_0 = arith.constant 0 : i32
    %c0_i32_1 = arith.constant 0 : i32
    return %c0_i32, %c0_i32_0 : i32, i32
  }
  func.func @transform_7(%arg0: i32) -> (i32, i32) {
    %c0_i32 = arith.constant 0 : i32
    %c0_i32_0 = arith.constant 0 : i32
    return %arg0, %c0_i32 : i32, i32
  }
}

</mosaic_0001>

<llo_original>
// kernel: _policy_forward.1
$region0: #{_policy_forward.1}
  #allocation0 [shape = 'u32[]', space=smem, size = 0x4, offset = 0x4, fixed_abs, tag = 'smem constant byte address 0x4 - core index']
  #allocation1 [shape = 'u32[144,128]{1,0:T(1,128)}', space=vmem, size = 0x12000, scoped, tag = 'internal scratch']
  %s0 = inlined_call_operand.vmem [shape: bf16[16,128], index: 0, kind: input, shape index: {}]
  %s1 = inlined_call_operand.hbm [shape: bf16[128,128], index: 1, kind: input, shape index: {}]
  %s2 = inlined_call_operand.vmem [shape: f32[1,128], index: 2, kind: input, shape index: {}]
  %s3 = inlined_call_operand.hbm [shape: bf16[128,128], index: 3, kind: input, shape index: {}]
  %s4 = inlined_call_operand.vmem [shape: f32[1,128], index: 4, kind: input, shape index: {}]
  %s5 = inlined_call_operand.hbm [shape: bf16[128,128], index: 5, kind: input, shape index: {}]
  %s6 = inlined_call_operand.vmem [shape: f32[1,128], index: 6, kind: input, shape index: {}]
  %s7 = inlined_call_operand.vmem [shape: f32[16,128], index: 7, kind: output, shape index: {}]
  %s8 = sld [smem:[#allocation0]]
  $region50: #{_policy_forward.1} parent=0
    _
  %s10 = ssub.s32 1, %s8
  %s11 = scalar_select 0, %s10, %s8
  $region1: #{_policy_forward.1} parent=0
    #allocation2 [shape = 'u8[32768]{0}', space=vmem, size = 0x8000, scoped, tag = 'input window, operand 1, single buffered']
    #allocation3 [shape = 's32[1]{0}', space=sflag, size = 0x4, scoped, tag = 'scoped memory for _policy_forward.1']
    #allocation4 [shape = 'u8[32768]{0}', space=vmem, size = 0x8000, scoped, tag = 'input window, operand 3, single buffered']
    #allocation5 [shape = 's32[1]{0}', space=sflag, size = 0x4, scoped, tag = 'scoped memory for _policy_forward.1']
    #allocation6 [shape = 'u8[32768]{0}', space=vmem, size = 0x8000, scoped, tag = 'input window, operand 5, single buffered']
    %12 = vsyncpa [#allocation3], 0
    %13 = vsyncpa [#allocation5], 0
    // Predicated region
    $region2: #{_policy_forward.1} parent=1 // pred_check
      _
    $region3: #{_policy_forward.1} parent=1 // pred_check_branch
      %15 = sbr.rel (0) target = $region5
    $region4: #{_policy_forward.1} parent=1 // pred_region
      _
    $region5: #{_policy_forward.1} parent=1 // pred_fallthru
      _
    // Predicated region
    $region6: #{_policy_forward.1} parent=1 // pred_check
      _
    $region7: #{_policy_forward.1} parent=1 // pred_check_branch
      %17 = sbr.rel (0) target = $region9
    $region8: #{_policy_forward.1} parent=1 // pred_region
      %s19 = ssub.s32 1024, 1024
      %20 = vsyncadd [#allocation3], %s19
      %s21 = sshll.u32 [#allocation2], 4
      %s22 = int_to_ptr.vmem [resolvable:$true] %s21
      %27 = dma.hbm_to_vmem [thread:$0]  %s1, 1024, %s22, [#allocation3], 64, 64, 4
    $region9: #{_policy_forward.1} parent=1 // pred_fallthru
      _
    // Predicated region
    $region10: #{_policy_forward.1} parent=1 // pred_check
      _
    $region11: #{_policy_forward.1} parent=1 // pred_check_branch
      %29 = sbr.rel (0) target = $region13
    $region12: #{_policy_forward.1} parent=1 // pred_region
      _
    $region13: #{_policy_forward.1} parent=1 // pred_fallthru
      _
    // Predicated region
    $region14: #{_policy_forward.1} parent=1 // pred_check
      _
    $region15: #{_policy_forward.1} parent=1 // pred_check_branch
      %31 = sbr.rel (0) target = $region17
    $region16: #{_policy_forward.1} parent=1 // pred_region
      %s33 = ssub.s32 1024, 1024
      %34 = vsyncadd [#allocation5], %s33
      %s35 = sshll.u32 [#allocation4], 4
      %s36 = int_to_ptr.vmem [resolvable:$true] %s35
      %41 = dma.hbm_to_vmem [thread:$0]  %s3, 1024, %s36, [#allocation5], 64, 64, 4
    $region17: #{_policy_forward.1} parent=1 // pred_fallthru
      _
    // Predicated region
    $region18: #{_policy_forward.1} parent=1 // pred_check
      _
    $region19: #{_policy_forward.1} parent=1 // pred_check_branch
      %43 = sbr.rel (0) target = $region21
    $region20: #{_policy_forward.1} parent=1 // pred_region
      _
    $region21: #{_policy_forward.1} parent=1 // pred_fallthru
      _
    // Predicated region
    $region22: #{_policy_forward.1} parent=1 // pred_check
      _
    $region23: #{_policy_forward.1} parent=1 // pred_check_branch
      %45 = sbr.rel (0) target = $region25
    $region24: #{_policy_forward.1} parent=1 // pred_region
      %s47 = ssub.s32 1024, 1024
      %48 = vsyncadd [#allocation5], %s47
      %s49 = sshll.u32 [#allocation6], 4
      %s50 = int_to_ptr.vmem [resolvable:$true] %s49
      %55 = dma.hbm_to_vmem [thread:$0]  %s5, 1024, %s50, [#allocation5], 64, 64, 4
    $region25: #{_policy_forward.1} parent=1 // pred_fallthru
      _
    // Predicated region
    $region26: #{_policy_forward.1} parent=1 // pred_check
      _
    $region27: #{_policy_forward.1} parent=1 // pred_check_branch
      %57 = sbr.rel (0) target = $region29
    $region28: #{_policy_forward.1} parent=1 // pred_region
      _
    $region29: #{_policy_forward.1} parent=1 // pred_fallthru
      _
    // Predicated region
    $region30: #{_policy_forward.1} parent=1 // pred_check
      _
    $region31: #{_policy_forward.1} parent=1 // pred_check_branch
      %59 = sbr.rel (0) target = $region33
    $region32: #{_policy_forward.1} parent=1 // pred_region
      %60 = dma.done [#allocation3], 1024
    $region33: #{_policy_forward.1} parent=1 // pred_fallthru
      _
    // Predicated region
    $region34: #{_policy_forward.1} parent=1 // pred_check
      _
    $region35: #{_policy_forward.1} parent=1 // pred_check_branch
      %62 = sbr.rel (0) target = $region37
    $region36: #{_policy_forward.1} parent=1 // pred_region
      %63 = dma.done [#allocation5], 1024
    $region37: #{_policy_forward.1} parent=1 // pred_fallthru
      _
    // Predicated region
    $region38: #{_policy_forward.1} parent=1 // pred_check
      _
    $region39: #{_policy_forward.1} parent=1 // pred_check_branch
      %65 = sbr.rel (0) target = $region41
    $region40: #{_policy_forward.1} parent=1 // pred_region
      %66 = dma.done [#allocation5], 1024
    $region41: #{_policy_forward.1} parent=1 // pred_fallthru
      _
    %v68 = vld [vmem:[%s0] sm:$0xf]
    %v69 = vld [vmem:[%s0 + $0x4] sm:$0xf]
    %v70 = vld [vmem:[#allocation2] sm:$0xf]
    %v71 = vld [vmem:[#allocation2 + $0x4] sm:$0xf]
    %v72 = vld [vmem:[#allocation2 + $0x8] sm:$0xf]
    %v73 = vld [vmem:[#allocation2 + $0xc] sm:$0xf]
    %v74 = vld [vmem:[#allocation2 + $0x10] sm:$0xf]
    %v75 = vld [vmem:[#allocation2 + $0x14] sm:$0xf]
    %v76 = vld [vmem:[#allocation2 + $0x18] sm:$0xf]
    %v77 = vld [vmem:[#allocation2 + $0x1c] sm:$0xf]
    %v78 = vld [vmem:[#allocation2 + $0x20] sm:$0xf]
    %v79 = vld [vmem:[#allocation2 + $0x24] sm:$0xf]
    %v80 = vld [vmem:[#allocation2 + $0x28] sm:$0xf]
    %v81 = vld [vmem:[#allocation2 + $0x2c] sm:$0xf]
    %v82 = vld [vmem:[#allocation2 + $0x30] sm:$0xf]
    %v83 = vld [vmem:[#allocation2 + $0x34] sm:$0xf]
    %v84 = vld [vmem:[#allocation2 + $0x38] sm:$0xf]
    %v85 = vld [vmem:[#allocation2 + $0x3c] sm:$0xf]
    %v86 = vld [vmem:[%s2] sm:$0x1]
    %v88 = vlaneseq
    %v89 = vshrl.u32 %v88, 7
    %v90 = vsub.s32 0, %v89
    %v91 = vrot.slane %v86, %v90
    %v95 = vunpack.c.l.b16 %v68
    %v96 = vunpack.c.l.b16 %v69
    %v97 = vpack.c.b16 %v96, %v95
    %v115 = vunpack.c.l.b16 %v70
    %v116 = vunpack.c.l.b16 %v71
    %v117 = vunpack.c.l.b16 %v72
    %v118 = vunpack.c.l.b16 %v73
    %v119 = vunpack.c.l.b16 %v74
    %v120 = vunpack.c.l.b16 %v75
    %v121 = vunpack.c.l.b16 %v76
    %v122 = vunpack.c.l.b16 %v77
    %v123 = vunpack.c.l.b16 %v78
    %v124 = vunpack.c.l.b16 %v79
    %v125 = vunpack.c.l.b16 %v80
    %v126 = vunpack.c.l.b16 %v81
    %v127 = vunpack.c.l.b16 %v82
    %v128 = vunpack.c.l.b16 %v83
    %v129 = vunpack.c.l.b16 %v84
    %v130 = vunpack.c.l.b16 %v85
    %v131 = vpack.c.b16 %v116, %v115
    %v132 = vpack.c.b16 %v118, %v117
    %v133 = vpack.c.b16 %v120, %v119
    %v134 = vpack.c.b16 %v122, %v121
    %v135 = vpack.c.b16 %v124, %v123
    %v136 = vpack.c.b16 %v126, %v125
    %v137 = vpack.c.b16 %v128, %v127
    %v138 = vpack.c.b16 %v130, %v129
    %147 = vmatprep.subr.bf16.mxu0 0
    %148 = vmatpush1.bf16.msra.mxu0 %v138
    %149 = vmatprep.subr.bf16.mxu0 0
    %150 = vmatpush1.bf16.msra.mxu0 %v137
    %151 = vmatprep.subr.bf16.mxu0 0
    %152 = vmatpush1.bf16.msra.mxu0 %v136
    %153 = vmatprep.subr.bf16.mxu0 0
    %154 = vmatpush1.bf16.msra.mxu0 %v135
    %155 = vmatprep.subr.bf16.mxu0 0
    %156 = vmatpush1.bf16.msra.mxu0 %v134
    %157 = vmatprep.subr.bf16.mxu0 0
    %158 = vmatpush1.bf16.msra.mxu0 %v133
    %159 = vmatprep.subr.bf16.mxu0 0
    %160 = vmatpush1.bf16.msra.mxu0 %v132
    %161 = vmatprep.subr.bf16.mxu0 0
    %162 = vmatpush1.bf16.msra.mxu0 %v131
    %163 = vmatprep.subr.bf16.mxu0 0
    %164 = vmatpush2.bf16.msra.mxu0 0
    %165 = vmatprep.subr.bf16.mxu0 0
    %166 = vmatpush2.bf16.msra.mxu0 0
    %167 = vmatprep.subr.bf16.mxu0 0
    %168 = vmatpush2.bf16.msra.mxu0 0
    %169 = vmatprep.subr.bf16.mxu0 0
    %170 = vmatpush2.bf16.msra.mxu0 0
    %171 = vmatprep.subr.bf16.mxu0 0
    %172 = vmatpush2.bf16.msra.mxu0 0
    %173 = vmatprep.subr.bf16.mxu0 0
    %174 = vmatpush2.bf16.msra.mxu0 0
    %175 = vmatprep.subr.bf16.mxu0 0
    %176 = vmatpush2.bf16.msra.mxu0 0
    %177 = vmatprep.subr.bf16.mxu0 0
    %178 = vmatpush2.bf16.msra.mxu0 0
    %179 = vmatprep.mubr.bf16.mxu0 0
    %180 = vmatmul.mubr.bf16.gmra.mxu0 %v97
    %v181 = vpop.f32.mrf.mxu0
    %v182 = vadd.f32 %v91, %v181
    %v183 = vpop.f32.mrf.mxu0
    %v184 = vpop.f32.mrf.mxu0
    %v185 = vadd.f32 %v91, %v184
    %v186 = vpop.f32.mrf.mxu0
    %187 = vdwg.mxu0
    %v188 = vmul.f32 %v182, 0.01
    %v189 = vmul.f32 %v185, 0.01
    %v190 = vmax.f32 %v182, %v188
    %v191 = vmax.f32 %v185, %v189
    %v192 = vpack.c.bf16 %v191, %v190
    %v193 = vld [vmem:[#allocation4] sm:$0xf]
    %v194 = vld [vmem:[#allocation4 + $0x4] sm:$0xf]
    %v195 = vld [vmem:[#allocation4 + $0x8] sm:$0xf]
    %v196 = vld [vmem:[#allocation4 + $0xc] sm:$0xf]
    %v197 = vld [vmem:[#allocation4 + $0x10] sm:$0xf]
    %v198 = vld [vmem:[#allocation4 + $0x14] sm:$0xf]
    %v199 = vld [vmem:[#allocation4 + $0x18] sm:$0xf]
    %v200 = vld [vmem:[#allocation4 + $0x1c] sm:$0xf]
    %v201 = vld [vmem:[#allocation4 + $0x20] sm:$0xf]
    %v202 = vld [vmem:[#allocation4 + $0x24] sm:$0xf]
    %v203 = vld [vmem:[#allocation4 + $0x28] sm:$0xf]
    %v204 = vld [vmem:[#allocation4 + $0x2c] sm:$0xf]
    %v205 = vld [vmem:[#allocation4 + $0x30] sm:$0xf]
    %v206 = vld [vmem:[#allocation4 + $0x34] sm:$0xf]
    %v207 = vld [vmem:[#allocation4 + $0x38] sm:$0xf]
    %v208 = vld [vmem:[#allocation4 + $0x3c] sm:$0xf]
    %v209 = vld [vmem:[%s4] sm:$0x1]
    %v211 = vlaneseq
    %v212 = vshrl.u32 %v211, 7
    %v213 = vsub.s32 0, %v212
    %v214 = vrot.slane %v209, %v213
    %v232 = vunpack.c.l.b16 %v193
    %v233 = vunpack.c.l.b16 %v194
    %v234 = vunpack.c.l.b16 %v195
    %v235 = vunpack.c.l.b16 %v196
    %v236 = vunpack.c.l.b16 %v197
    %v237 = vunpack.c.l.b16 %v198
    %v238 = vunpack.c.l.b16 %v199
    %v239 = vunpack.c.l.b16 %v200
    %v240 = vunpack.c.l.b16 %v201
    %v241 = vunpack.c.l.b16 %v202
    %v242 = vunpack.c.l.b16 %v203
    %v243 = vunpack.c.l.b16 %v204
    %v244 = vunpack.c.l.b16 %v205
    %v245 = vunpack.c.l.b16 %v206
    %v246 = vunpack.c.l.b16 %v207
    %v247 = vunpack.c.l.b16 %v208
    %v248 = vpack.c.b16 %v233, %v232
    %v249 = vpack.c.b16 %v235, %v234
    %v250 = vpack.c.b16 %v237, %v236
    %v251 = vpack.c.b16 %v239, %v238
    %v252 = vpack.c.b16 %v241, %v240
    %v253 = vpack.c.b16 %v243, %v242
    %v254 = vpack.c.b16 %v245, %v244
    %v255 = vpack.c.b16 %v247, %v246
    %264 = vmatprep.subr.bf16.mxu0 0
    %265 = vmatpush1.bf16.msra.mxu0 %v255
    %266 = vmatprep.subr.bf16.mxu0 0
    %267 = vmatpush1.bf16.msra.mxu0 %v254
    %268 = vmatprep.subr.bf16.mxu0 0
    %269 = vmatpush1.bf16.msra.mxu0 %v253
    %270 = vmatprep.subr.bf16.mxu0 0
    %271 = vmatpush1.bf16.msra.mxu0 %v252
    %272 = vmatprep.subr.bf16.mxu0 0
    %273 = vmatpush1.bf16.msra.mxu0 %v251
    %274 = vmatprep.subr.bf16.mxu0 0
    %275 = vmatpush1.bf16.msra.mxu0 %v250
    %276 = vmatprep.subr.bf16.mxu0 0
    %277 = vmatpush1.bf16.msra.mxu0 %v249
    %278 = vmatprep.subr.bf16.mxu0 0
    %279 = vmatpush1.bf16.msra.mxu0 %v248
    %280 = vmatprep.subr.bf16.mxu0 0
    %281 = vmatpush2.bf16.msra.mxu0 0
    %282 = vmatprep.subr.bf16.mxu0 0
    %283 = vmatpush2.bf16.msra.mxu0 0
    %284 = vmatprep.subr.bf16.mxu0 0
    %285 = vmatpush2.bf16.msra.mxu0 0
    %286 = vmatprep.subr.bf16.mxu0 0
    %287 = vmatpush2.bf16.msra.mxu0 0
    %288 = vmatprep.subr.bf16.mxu0 0
    %289 = vmatpush2.bf16.msra.mxu0 0
    %290 = vmatprep.subr.bf16.mxu0 0
    %291 = vmatpush2.bf16.msra.mxu0 0
    %292 = vmatprep.subr.bf16.mxu0 0
    %293 = vmatpush2.bf16.msra.mxu0 0
    %294 = vmatprep.subr.bf16.mxu0 0
    %295 = vmatpush2.bf16.msra.mxu0 0
    %296 = vmatprep.mubr.bf16.mxu0 0
    %297 = vmatmul.mubr.bf16.gmra.mxu0 %v192
    %v298 = vpop.f32.mrf.mxu0
    %v299 = vadd.f32 %v214, %v298
    %v300 = vpop.f32.mrf.mxu0
    %v301 = vpop.f32.mrf.mxu0
    %v302 = vadd.f32 %v214, %v301
    %v303 = vpop.f32.mrf.mxu0
    %304 = vdwg.mxu0
    %v305 = vmul.f32 %v299, 0.01
    %v306 = vmul.f32 %v302, 0.01
    %v307 = vmax.f32 %v299, %v305
    %v308 = vmax.f32 %v302, %v306
    %v309 = vpack.c.bf16 %v308, %v307
    %v310 = vld [vmem:[#allocation6] sm:$0xf]
    %v311 = vld [vmem:[#allocation6 + $0x4] sm:$0xf]
    %v312 = vld [vmem:[#allocation6 + $0x8] sm:$0xf]
    %v313 = vld [vmem:[#allocation6 + $0xc] sm:$0xf]
    %v314 = vld [vmem:[#allocation6 + $0x10] sm:$0xf]
    %v315 = vld [vmem:[#allocation6 + $0x14] sm:$0xf]
    %v316 = vld [vmem:[#allocation6 + $0x18] sm:$0xf]
    %v317 = vld [vmem:[#allocation6 + $0x1c] sm:$0xf]
    %v318 = vld [vmem:[#allocation6 + $0x20] sm:$0xf]
    %v319 = vld [vmem:[#allocation6 + $0x24] sm:$0xf]
    %v320 = vld [vmem:[#allocation6 + $0x28] sm:$0xf]
    %v321 = vld [vmem:[#allocation6 + $0x2c] sm:$0xf]
    %v322 = vld [vmem:[#allocation6 + $0x30] sm:$0xf]
    %v323 = vld [vmem:[#allocation6 + $0x34] sm:$0xf]
    %v324 = vld [vmem:[#allocation6 + $0x38] sm:$0xf]
    %v325 = vld [vmem:[#allocation6 + $0x3c] sm:$0xf]
    %v326 = vld [vmem:[%s6] sm:$0x1]
    %v328 = vlaneseq
    %v329 = vshrl.u32 %v328, 7
    %v330 = vsub.s32 0, %v329
    %v331 = vrot.slane %v326, %v330
    %v349 = vunpack.c.l.b16 %v310
    %v350 = vunpack.c.l.b16 %v311
    %v351 = vunpack.c.l.b16 %v312
    %v352 = vunpack.c.l.b16 %v313
    %v353 = vunpack.c.l.b16 %v314
    %v354 = vunpack.c.l.b16 %v315
    %v355 = vunpack.c.l.b16 %v316
    %v356 = vunpack.c.l.b16 %v317
    %v357 = vunpack.c.l.b16 %v318
    %v358 = vunpack.c.l.b16 %v319
    %v359 = vunpack.c.l.b16 %v320
    %v360 = vunpack.c.l.b16 %v321
    %v361 = vunpack.c.l.b16 %v322
    %v362 = vunpack.c.l.b16 %v323
    %v363 = vunpack.c.l.b16 %v324
    %v364 = vunpack.c.l.b16 %v325
    %v365 = vpack.c.b16 %v350, %v349
    %v366 = vpack.c.b16 %v352, %v351
    %v367 = vpack.c.b16 %v354, %v353
    %v368 = vpack.c.b16 %v356, %v355
    %v369 = vpack.c.b16 %v358, %v357
    %v370 = vpack.c.b16 %v360, %v359
    %v371 = vpack.c.b16 %v362, %v361
    %v372 = vpack.c.b16 %v364, %v363
    %381 = vmatprep.subr.bf16.mxu0 0
    %382 = vmatpush1.bf16.msra.mxu0 %v372
    %383 = vmatprep.subr.bf16.mxu0 0
    %384 = vmatpush1.bf16.msra.mxu0 %v371
    %385 = vmatprep.subr.bf16.mxu0 0
    %386 = vmatpush1.bf16.msra.mxu0 %v370
    %387 = vmatprep.subr.bf16.mxu0 0
    %388 = vmatpush1.bf16.msra.mxu0 %v369
    %389 = vmatprep.subr.bf16.mxu0 0
    %390 = vmatpush1.bf16.msra.mxu0 %v368
    %391 = vmatprep.subr.bf16.mxu0 0
    %392 = vmatpush1.bf16.msra.mxu0 %v367
    %393 = vmatprep.subr.bf16.mxu0 0
    %394 = vmatpush1.bf16.msra.mxu0 %v366
    %395 = vmatprep.subr.bf16.mxu0 0
    %396 = vmatpush1.bf16.msra.mxu0 %v365
    %397 = vmatprep.subr.bf16.mxu0 0
    %398 = vmatpush2.bf16.msra.mxu0 0
    %399 = vmatprep.subr.bf16.mxu0 0
    %400 = vmatpush2.bf16.msra.mxu0 0
    %401 = vmatprep.subr.bf16.mxu0 0
    %402 = vmatpush2.bf16.msra.mxu0 0
    %403 = vmatprep.subr.bf16.mxu0 0
    %404 = vmatpush2.bf16.msra.mxu0 0
    %405 = vmatprep.subr.bf16.mxu0 0
    %406 = vmatpush2.bf16.msra.mxu0 0
    %407 = vmatprep.subr.bf16.mxu0 0
    %408 = vmatpush2.bf16.msra.mxu0 0
    %409 = vmatprep.subr.bf16.mxu0 0
    %410 = vmatpush2.bf16.msra.mxu0 0
    %411 = vmatprep.subr.bf16.mxu0 0
    %412 = vmatpush2.bf16.msra.mxu0 0
    %413 = vmatprep.mubr.bf16.mxu0 0
    %414 = vmatmul.mubr.bf16.gmra.mxu0 %v309
    %v415 = vpop.f32.mrf.mxu0
    %v416 = vadd.f32 %v331, %v415
    %v417 = vpop.f32.mrf.mxu0
    %v418 = vpop.f32.mrf.mxu0
    %v419 = vadd.f32 %v331, %v418
    %v420 = vpop.f32.mrf.mxu0
    %421 = vdwg.mxu0
    %422 = vst [vmem:[%s7] sm:$0xff] %v416
    %423 = vst [vmem:[%s7 + $0x8] sm:$0xff] %v419
    // Predicated region
    $region42: #{_policy_forward.1} parent=1 // pred_check
      _
    $region43: #{_policy_forward.1} parent=1 // pred_check_branch
      %425 = sbr.rel (0) target = $region45
    $region44: #{_policy_forward.1} parent=1 // pred_region
      _
    $region45: #{_policy_forward.1} parent=1 // pred_fallthru
      _
    // Predicated region
    $region46: #{_policy_forward.1} parent=1 // pred_check
      _
    $region47: #{_policy_forward.1} parent=1 // pred_check_branch
      %427 = sbr.rel (0) target = $region49
    $region48: #{_policy_forward.1} parent=1 // pred_region
      _
    $region49: #{_policy_forward.1} parent=1 // pred_fallthru
      _
    %428 = vsyncpa [#allocation3], 1
    %429 = vsyncpa [#allocation5], 1

</llo_original>
